<compile_context>
chip_gen: v7x
topology: tpu7x:2x2x1
jax: 0.10.0
libtpu: 0.0.40
codegen_flags: <defaults>
</compile_context>

<pallas_src>
import functools

import jax
import jax.numpy as jnp
from jax.experimental import pallas as pl
from jax.experimental.pallas import tpu as pltpu

EPS = 1e-5  # nn.BatchNorm2d default


# ----------------------------------------------------------------------------
# Fused 3x3 'same' conv + ReLU on one (block_h, W) row tile
# ----------------------------------------------------------------------------
def _conv_relu_kernel(x_ref, w_ref, o_ref, *, block_h, W, CIN, COUT):
    """x_ref: (1, H+2, W+2, CIN) padded normalized input (bf16), resident per n
       w_ref: (9*CIN, COUT)      conv weights, taps ordered (dy, dx, cin) (bf16)
       o_ref: (1, block_h, W, COUT) output tile (f32)"""
    ht = pl.program_id(1)
    row0 = pl.multiple_of(ht * block_h, block_h)

    # Halo tile: block_h + 2 padded input rows feed block_h output rows.
    xt = x_ref[0, pl.ds(row0, block_h + 2), :, :]          # (TH+2, W+2, CIN)

    # im2col: 9 shifted views -> (TH, W, 9*CIN) -> (TH*W, 9*CIN)
    taps = [xt[dy:dy + block_h, dx:dx + W, :]
            for dy in range(3) for dx in range(3)]
    patches = jnp.concatenate(taps, axis=-1).reshape(block_h * W, 9 * CIN)

    # Single MXU matmul (bf16 inputs, f32 accumulation) replaces 9 K=CIN dots.
    acc = jnp.dot(patches, w_ref[...], preferred_element_type=jnp.float32)
    out = jnp.maximum(acc, 0.0).reshape(block_h, W, COUT)
    o_ref[0] = out.astype(o_ref.dtype)


def bfcnn_forward(x_nchw, conv_weight, *, block_h=None):
    """x_nchw: (N, CIN, H, W); conv_weight: (COUT, CIN, 3, 3) (PyTorch layout)."""
    N, CIN, H, W = x_nchw.shape
    COUT = conv_weight.shape[0]

    # --- BatchNorm (training-mode: batch mean, biased variance, eps=1e-5) ----
    # Plain XLA reductions (memory-bound); fuse with the layout change below.
    x_nhwc = jnp.transpose(x_nchw, (0, 2, 3, 1)).astype(jnp.float32)
    mean = jnp.mean(x_nhwc, axis=(0, 1, 2))
    var = jnp.var(x_nhwc, axis=(0, 1, 2))                  # biased, two-pass
    inv_std = jax.lax.rsqrt(var + EPS)

    # Normalize + zero-pad (== 'same' padding of the normalized input) in one
    # fused XLA producer pass; bf16 halves DMA bytes and is MXU-native.
    xpad = jnp.pad((x_nhwc - mean) * inv_std,
                   ((0, 0), (1, 1), (1, 1), (0, 0))).astype(jnp.bfloat16)

    # (COUT, CIN, kh, kw) -> (kh, kw, CIN, COUT) -> (9*CIN, COUT);
    # flattened tap index = (dy*3 + dx)*CIN + cin, matching the kernel im2col.
    w_mat = jnp.transpose(conv_weight, (2, 3, 1, 0)).reshape(
        9 * CIN, COUT).astype(jnp.bfloat16)

    # Row-tile height: as large as reasonable (per-step overhead dominates
    # small tiles).  Whole image per step when H <= 32.
    if block_h is None:
        if H <= 32:
            block_h = H
        else:
            block_h = next(d for d in (32, 16, 8, 4, 2, 1) if H % d == 0)
    assert H % block_h == 0
    num_h = H // block_h

    kernel = functools.partial(_conv_relu_kernel, block_h=block_h, W=W,
                               CIN=CIN, COUT=COUT)

    # Explicit VMEM budget (v7x has only 64 MiB physical VMEM): resident padded
    # image + resident weights + double-buffered output tile + im2col temps.
    est = ((H + 2) * (W + 2) * CIN * 2                     # padded image (bf16)
           + 9 * CIN * COUT * 2                            # weights (bf16)
           + 2 * block_h * W * COUT * 4                    # output tile x2
           + 4 * (block_h + 2) * (W + 2) * 9 * CIN * 4)    # im2col temporaries
    vmem_limit = int(min(max(4 * est, 8 << 20), 32 << 20))

    out_nhwc = pl.pallas_call(
        kernel,
        out_shape=jax.ShapeDtypeStruct((N, H, W, COUT), jnp.float32),
        grid_spec=pltpu.PrefetchScalarGridSpec(
            num_scalar_prefetch=0,
            grid=(N, num_h),
            in_specs=[
                # Full padded image per batch element; block index does not
                # depend on the row-tile axis -> DMA'd once per n, no halo
                # duplication, no triple row refs.
                pl.BlockSpec((1, H + 2, W + 2, CIN),
                             lambda n, h: (n, 0, 0, 0)),
                # Weights resident for the whole launch.
                pl.BlockSpec((9 * CIN, COUT), lambda n, h: (0, 0)),
            ],
            out_specs=pl.BlockSpec((1, block_h, W, COUT),
                                   lambda n, h: (n, h, 0, 0))),
        compiler_params=pltpu.CompilerParams(
            # Both axes are independent -> shard across v7x's two TensorCores
            # even when N == 1 (row tiles provide the parallel extent).
            dimension_semantics=("parallel", "parallel"),
            vmem_limit_bytes=vmem_limit),
    )(xpad, w_mat)

    return jnp.transpose(out_nhwc, (0, 3, 1, 2))           # back to NCHW


# ----------------------------------------------------------------------------
# Pure-JAX reference (for correctness check)
# ----------------------------------------------------------------------------
def bfcnn_reference(x_nchw, conv_weight):
    mean = jnp.mean(x_nchw, axis=(0, 2, 3), keepdims=True)
    var = jnp.var(x_nchw, axis=(0, 2, 3), keepdims=True)   # biased
    xn = (x_nchw - mean) / jnp.sqrt(var + EPS)
    y = jax.lax.conv_general_dilated(
        xn, conv_weight, window_strides=(1, 1), padding="SAME",
        dimension_numbers=("NCHW", "OIHW", "NCHW"))
    return jnp.maximum(y, 0.0)


if __name__ == "__main__":
    key = jax.random.PRNGKey(0)
    kx, kw = jax.random.split(key)

    N, CIN, H, W, COUT = 2, 4, 16, 16, 32
    x = jax.random.normal(kx, (N, CIN, H, W), dtype=jnp.float32)
    w = 0.1 * jax.random.normal(kw, (COUT, CIN, 3, 3), dtype=jnp.float32)

    out = jax.jit(bfcnn_forward)(x, w)
    out = jax.block_until_ready(out)

    ref = bfcnn_reference(x, w)
    assert out.shape == (N, COUT, H, W), out.shape
    # bf16 matmul inputs (f32 accumulation) -> bf16-level tolerance vs f32 ref.
    max_err = float(jnp.max(jnp.abs(out - ref)))
    assert jnp.allclose(out, ref, rtol=3e-2, atol=3e-2), max_err

    print("KERNEL_OK")
</pallas_src>

<mosaic_0001>
module attributes {stable_mosaic.version = 11 : i64} {
  func.func @_conv_relu_kernel(%arg0: i32, %arg1: i32, %arg2: memref<1x18x18x4xbf16, #tpu.memory_space<vmem>>, %arg3: memref<36x32xbf16, #tpu.memory_space<vmem>>, %arg4: memref<1x16x16x32xf32, #tpu.memory_space<vmem>>) attributes {dimension_semantics = [#tpu.dimension_semantics<parallel>, #tpu.dimension_semantics<parallel>], iteration_bounds = array<i64: 2, 1>, scalar_prefetch = 0 : i64, scratch_operands = 0 : i64, tpu.core_type = #tpu.core_type<tc>, window_params = [{transform_indices = @transform_0, window_bounds = array<i64: 1, 18, 18, 4>}, {pipeline_mode = #tpu.pipeline_mode<synchronous>, transform_indices = @transform_1, window_bounds = array<i64: 36, 32>}, {transform_indices = @transform_2, window_bounds = array<i64: 1, 16, 16, 32>}]} {
    %c16_i32 = arith.constant 16 : i32
    %0 = arith.muli %arg1, %c16_i32 : i32
    %1 = tpu.assume_multiple %0, 16 : i32
    %c0 = arith.constant 0 : index
    %2 = arith.index_cast %1 : i32 to index
    %c0_0 = arith.constant 0 : index
    %c0_1 = arith.constant 0 : index
    %3 = vector.load %arg2[%c0, %2, %c0_0, %c0_1] : memref<1x18x18x4xbf16, #tpu.memory_space<vmem>>, vector<1x18x18x4xbf16>
    %4 = vector.shape_cast %3 : vector<1x18x18x4xbf16> to vector<18x18x4xbf16>
    %5 = vector.extract_strided_slice %4 {offsets = [0, 0, 0], sizes = [16, 16, 4], strides = [1, 1, 1]} : vector<18x18x4xbf16> to vector<16x16x4xbf16>
    %6 = vector.extract_strided_slice %4 {offsets = [0, 1, 0], sizes = [16, 16, 4], strides = [1, 1, 1]} : vector<18x18x4xbf16> to vector<16x16x4xbf16>
    %7 = vector.extract_strided_slice %4 {offsets = [0, 2, 0], sizes = [16, 16, 4], strides = [1, 1, 1]} : vector<18x18x4xbf16> to vector<16x16x4xbf16>
    %8 = vector.extract_strided_slice %4 {offsets = [1, 0, 0], sizes = [16, 16, 4], strides = [1, 1, 1]} : vector<18x18x4xbf16> to vector<16x16x4xbf16>
    %9 = vector.extract_strided_slice %4 {offsets = [1, 1, 0], sizes = [16, 16, 4], strides = [1, 1, 1]} : vector<18x18x4xbf16> to vector<16x16x4xbf16>
    %10 = vector.extract_strided_slice %4 {offsets = [1, 2, 0], sizes = [16, 16, 4], strides = [1, 1, 1]} : vector<18x18x4xbf16> to vector<16x16x4xbf16>
    %11 = vector.extract_strided_slice %4 {offsets = [2, 0, 0], sizes = [16, 16, 4], strides = [1, 1, 1]} : vector<18x18x4xbf16> to vector<16x16x4xbf16>
    %12 = vector.extract_strided_slice %4 {offsets = [2, 1, 0], sizes = [16, 16, 4], strides = [1, 1, 1]} : vector<18x18x4xbf16> to vector<16x16x4xbf16>
    %13 = vector.extract_strided_slice %4 {offsets = [2, 2, 0], sizes = [16, 16, 4], strides = [1, 1, 1]} : vector<18x18x4xbf16> to vector<16x16x4xbf16>
    %14 = tpu.concatenate %5, %6, %7, %8, %9, %10, %11, %12, %13 in 2 : vector<16x16x4xbf16>, vector<16x16x4xbf16>, vector<16x16x4xbf16>, vector<16x16x4xbf16>, vector<16x16x4xbf16>, vector<16x16x4xbf16>, vector<16x16x4xbf16>, vector<16x16x4xbf16>, vector<16x16x4xbf16> -> vector<16x16x36xbf16>
    %15 = vector.shape_cast %14 : vector<16x16x36xbf16> to vector<256x36xbf16>
    %c0_2 = arith.constant 0 : index
    %c0_3 = arith.constant 0 : index
    %16 = vector.load %arg3[%c0_2, %c0_3] : memref<36x32xbf16, #tpu.memory_space<vmem>>, vector<36x32xbf16>
    %cst = arith.constant dense<0.000000e+00> : vector<256x32xf32>
    %17 = tpu.matmul %15, %16, %cst {dimension_numbers = #tpu.dot_dimension_numbers<[1], [0], [0], [1], [0, 0, 1, 1], [], []>} : vector<256x36xbf16>, vector<36x32xbf16>, vector<256x32xf32> -> vector<256x32xf32>
    %cst_4 = arith.constant 0.000000e+00 : f32
    %18 = vector.broadcast %cst_4 : f32 to vector<256x32xf32>
    %19 = arith.maximumf %17, %18 : vector<256x32xf32>
    %20 = vector.shape_cast %19 : vector<256x32xf32> to vector<16x16x32xf32>
    %c0_5 = arith.constant 0 : index
    %c0_6 = arith.constant 0 : index
    %c0_7 = arith.constant 0 : index
    %c0_8 = arith.constant 0 : index
    %21 = vector.load %arg4[%c0_5, %c0_6, %c0_7, %c0_8] : memref<1x16x16x32xf32, #tpu.memory_space<vmem>>, vector<1x16x16x32xf32>
    %22 = vector.shape_cast %21 : vector<1x16x16x32xf32> to vector<16x16x32xf32>
    %23 = vector.shape_cast %20 : vector<16x16x32xf32> to vector<1x16x16x32xf32>
    tpu.vector_store %arg4[%c0_5, %c0_6, %c0_7, %c0_8], %23 {strides = array<i32>} : memref<1x16x16x32xf32, #tpu.memory_space<vmem>>, vector<1x16x16x32xf32>,
    return
  }
  func.func @transform_0(%arg0: i32, %arg1: i32) -> (i32, i32, i32, i32) {
    %c0_i32 = arith.constant 0 : i32
    %c0_i32_0 = arith.constant 0 : i32
    %c0_i32_1 = arith.constant 0 : i32
    %c0_i32_2 = arith.constant 0 : i32
    return %arg0, %c0_i32, %c0_i32_0, %c0_i32_1 : i32, i32, i32, i32
  }
  func.func @transform_1(%arg0: i32, %arg1: i32) -> (i32, i32) {
    %c0_i32 = arith.constant 0 : i32
    %c0_i32_0 = arith.constant 0 : i32
    %c0_i32_1 = arith.constant 0 : i32
    return %c0_i32, %c0_i32_0 : i32, i32
  }
  func.func @transform_2(%arg0: i32, %arg1: i32) -> (i32, i32, i32, i32) {
    %c0_i32 = arith.constant 0 : i32
    %c0_i32_0 = arith.constant 0 : i32
    %c0_i32_1 = arith.constant 0 : i32
    return %arg0, %arg1, %c0_i32, %c0_i32_0 : i32, i32, i32, i32
  }
}

</mosaic_0001>

<llo_original>
// kernel: bfcnn_forward.1
$region0: #{bfcnn_forward.1}
  #allocation0 [shape = 'u32[]', space=smem, size = 0x4, offset = 0x4, fixed_abs, tag = 'smem constant byte address 0x4 - core index']
  #allocation1 [shape = 'u32[144,128]{1,0:T(1,128)}', space=vmem, size = 0x12000, scoped, tag = 'internal scratch']
  %s0 = inlined_call_operand.vmem [shape: bf16[2,18,18,4], index: 0, kind: input, shape index: {}]
  %s1 = inlined_call_operand.vmem [shape: bf16[36,32], index: 1, kind: input, shape index: {}]
  %s2 = inlined_call_operand.hbm [shape: f32[2,16,16,32], index: 2, kind: output, shape index: {}]
  %s3 = sld [smem:[#allocation0]]
  $region41: #{bfcnn_forward.1} parent=0
    _
  %s5 = ssub.s32 1, %s3
  %s6 = scalar_select 0, %s5, %s3
  $region1: #{bfcnn_forward.1} parent=0
    #allocation2 [shape = 'u8[262144]{0}', space=vmem, size = 0x40000, scoped, tag = 'output window, operand 0']
    #allocation3 [shape = 's32[2]{0}', space=sflag, size = 0x8, scoped, tag = 'scoped memory for bfcnn_forward.1']
    %7 = vsyncpa [#allocation3], 0
    %s8 = scalar_lea.sflag [#allocation3], 1
    %9 = vsyncpa %s8, 0
    loop: start=0, step=1, limit=4
    $region2: #{bfcnn_forward.1} parent=1 // loop_pre_header
      _
    $region3: #{bfcnn_forward.1} parent=1 // loop_header
      %s11 = sphi 0, %s15
      %p12 = scmp.ge.s32.totalorder %s11, 4
      %s18 = sphi 0, %s30
      %s19 = sphi 0, %s26
      %s20 = sphi 0, %s18
      %s21 = sphi 0, %s19
      %s22 = sphi 0, %s20
      %s23 = sphi 0, %s21
      %s33 = sphi 0, %s35
      %s36 = sphi 0, %s33
      %s37 = sphi 0, %s36
      %s53 = sphi 0, %s37
      %s57 = sphi 0, %s57
      %s59 = sphi 0, %s57
      %s60 = sphi 0, %s59
      %s74 = sphi 0, %s60
      %s82 = sphi 0, %s84
      %s85 = sphi 0, %s82
      %s86 = sphi 0, %s85
      %s102 = sphi 0, %s86
    $region4: #{bfcnn_forward.1} parent=1 // loop_header_branch
      %14 = sbr.rel (%p12) target = $region8
    $region5: #{bfcnn_forward.1} parent=1 // loop_body
      %s16 = ssub.s32 %s11, 1
      %s17 = ssub.s32 %s11, 2
      %s24 = sadd.s32 1, %s19
      %p25 = scmp.ge.s32.totalorder %s24, 1
      %s26 = scalar_select %p25, 0, %s24
      %s27 = sadd.s32 1, %s18
      %s28 = scalar_select %p25, %s27, %s18
      %p29 = scmp.ge.s32.totalorder %s28, 2
      %s30 = scalar_select %p29, 0, %s28
      %s31 = ssub.s32 %s18, %s30
      %p32 = scmp.eq.s32.totalorder %s31, 0
      %s34 = sadd.s32 %s33, 1
      %s35 = scalar_select %p32, %s33, %s34
      %p38 = pneg %p32
      %p39 = scmp.eq.s32.totalorder %s11, 1
      %p40 = por %p38, %p39
      %p41 = scmp.ne.s32.totalorder %s33, %s36
      %p42 = scmp.eq.s32.totalorder %s11, 0
      %p43 = por %p41, %p42
      %p44 = scmp.ne.s32.totalorder %s33, %s36
      %p45 = scmp.eq.s32.totalorder %s16, 1
      %p46 = por %p44, %p45
      %p47 = scmp.ne.s32.totalorder %s36, %s37
      %p48 = scmp.eq.s32.totalorder %s16, 0
      %p49 = por %p47, %p48
      %p50 = scmp.ne.s32.totalorder %s36, %s37
      %p51 = scmp.eq.s32.totalorder %s17, 1
      %p52 = por %p50, %p51
      %p54 = scmp.ne.s32.totalorder %s37, %s53
      %p55 = scmp.eq.s32.totalorder %s17, 0
      %p56 = por %p54, %p55
      %s58 = sadd.s32 %s57, 1
      %p61 = scmp.eq.s32.totalorder %s11, 1
      %p62 = scmp.ne.s32.totalorder %s57, %s59
      %p63 = scmp.eq.s32.totalorder %s11, 0
      %p64 = por %p62, %p63
      %p65 = scmp.ne.s32.totalorder %s57, %s59
      %p66 = scmp.eq.s32.totalorder %s16, 1
      %p67 = por %p65, %p66
      %p68 = scmp.ne.s32.totalorder %s59, %s60
      %p69 = scmp.eq.s32.totalorder %s16, 0
      %p70 = por %p68, %p69
      %p71 = scmp.ne.s32.totalorder %s59, %s60
      %p72 = scmp.eq.s32.totalorder %s17, 1
      %p73 = por %p71, %p72
      %p75 = scmp.ne.s32.totalorder %s60, %s74
      %p76 = scmp.eq.s32.totalorder %s17, 0
      %p77 = por %p75, %p76
      %s78 = ssub.s32 %s18, %s30
      %s79 = ssub.s32 %s19, %s26
      %s80 = sor.u32 %s78, %s79
      %p81 = scmp.eq.s32.totalorder %s80, 0
      %s83 = sadd.s32 %s82, 1
      %s84 = scalar_select %p81, %s82, %s83
      %p87 = pneg %p81
      %p88 = scmp.eq.s32.totalorder %s11, 1
      %p89 = por %p87, %p88
      %p90 = scmp.ne.s32.totalorder %s82, %s85
      %p91 = scmp.eq.s32.totalorder %s11, 0
      %p92 = por %p90, %p91
      %p93 = scmp.ne.s32.totalorder %s82, %s85
      %p94 = scmp.eq.s32.totalorder %s16, 1
      %p95 = por %p93, %p94
      %p96 = scmp.ne.s32.totalorder %s85, %s86
      %p97 = scmp.eq.s32.totalorder %s16, 0
      %p98 = por %p96, %p97
      %p99 = scmp.ne.s32.totalorder %s85, %s86
      %p100 = scmp.eq.s32.totalorder %s17, 1
      %p101 = por %p99, %p100
      %p103 = scmp.ne.s32.totalorder %s86, %s102
      %p104 = scmp.eq.s32.totalorder %s17, 0
      %p105 = por %p103, %p104
      %p106 = scmp.le.s32.totalorder 1, %s11
      %p107 = scmp.lt.s32.totalorder %s11, 3
      %p108 = pnand %p106, %p107
      %p109 = pneg %p108
      // Predicated region
      $region9: #{bfcnn_forward.1} parent=5 // pred_check
        _
      $region10: #{bfcnn_forward.1} parent=5 // pred_check_branch
        %111 = sbr.rel (%p108) target = $region12
      $region11: #{bfcnn_forward.1} parent=5 // pred_region
        %s112 = ssub.s32 %s11, 1
        // Predicated region
        $region13: #{bfcnn_forward.1} parent=11 // pred_check
          %p113 = pneg %p70
        $region14: #{bfcnn_forward.1} parent=11 // pred_check_branch
          %115 = sbr.rel (%p113) target = $region16
        $region15: #{bfcnn_forward.1} parent=11 // pred_region
          _
        $region16: #{bfcnn_forward.1} parent=11 // pred_fallthru
          _
      $region12: #{bfcnn_forward.1} parent=5 // pred_fallthru
        _
      %p116 = scmp.lt.s32.totalorder %s11, 2
      // Predicated region
      $region17: #{bfcnn_forward.1} parent=5 // pred_check
        %p117 = pneg %p116
      $region18: #{bfcnn_forward.1} parent=5 // pred_check_branch
        %119 = sbr.rel (%p117) target = $region20
      $region19: #{bfcnn_forward.1} parent=5 // pred_region
        // Predicated region
        $region21: #{bfcnn_forward.1} parent=19 // pred_check
          %p120 = pneg %p43
        $region22: #{bfcnn_forward.1} parent=19 // pred_check_branch
          %122 = sbr.rel (%p120) target = $region24
        $region23: #{bfcnn_forward.1} parent=19 // pred_region
          %p123 = scmp.lt.s32.totalorder %s18, 1
          %s124 = scalar_select %p123, %s18, 1
          %s125 = smul.addr %s124, 54
          %s126 = smul.addr %s125, 4
          %s127 = scalar_lea.vmem %s0, %s126
        $region24: #{bfcnn_forward.1} parent=19 // pred_fallthru
          _
      $region20: #{bfcnn_forward.1} parent=5 // pred_fallthru
        _
      %p128 = scmp.le.s32.totalorder 1, %s11
      %p129 = scmp.lt.s32.totalorder %s11, 3
      %p130 = pnand %p128, %p129
      %p131 = pneg %p130
      // Predicated region
      $region25: #{bfcnn_forward.1} parent=5 // pred_check
        _
      $region26: #{bfcnn_forward.1} parent=5 // pred_check_branch
        %133 = sbr.rel (%p130) target = $region28
      $region27: #{bfcnn_forward.1} parent=5 // pred_region
        %s134 = ssub.s32 %s11, 1
        %p135 = scmp.lt.s32.totalorder %s20, 1
        %s136 = scalar_select %p135, %s20, 1
        %s137 = smul.addr %s136, 54
        %s138 = smul.addr %s137, 4
        %s139 = scalar_lea.vmem %s0, %s138
        %p140 = pneg %p49
        %p141 = pneg %p46
        %p142 = pneg %p70
        %p143 = pneg %p67
        %p144 = pneg %p98
        %p145 = pneg %p95
        %s146 = sand.u32 %s85, 1
        %s147 = scalar_lea.sflag [#allocation3], %s146
        %s148 = sand.u32 %s85, 1
        %s149 = smul.addr %s148, 256
        %s150 = scalar_lea.vmem [#allocation2], %s149
        %p151 = scmp.lt.s32.totalorder %s20, 1
        %s152 = scalar_select %p151, %s20, 1
        %s153 = smul.addr %s152, 54
        %s154 = smul.addr %s153, 4
        %s155 = scalar_lea.vmem %s0, %s154
        %s156 = smul.u32 16, %s21
        %s158 = smul.u32 %s21, 16
        %s159 = smul.u32 %s158, 3
        %s160 = smul.addr %s159, 4
        %s161 = scalar_lea.vmem %s155, %s160
        %v162 = vld [vmem:[%s161] sm:$0xf]
        %v163 = vld [vmem:[%s161 + $0x4] sm:$0xf]
        %v164 = vld [vmem:[%s161 + $0x8] sm:$0x1]
        %v165 = vld [vmem:[%s161 + $0xc] sm:$0xf]
        %v166 = vld [vmem:[%s161 + $0x10] sm:$0xf]
        %v167 = vld [vmem:[%s161 + $0x14] sm:$0x1]
        %v168 = vld [vmem:[%s161 + $0x18] sm:$0xf]
        %v169 = vld [vmem:[%s161 + $0x1c] sm:$0xf]
        %v170 = vld [vmem:[%s161 + $0x20] sm:$0x1]
        %v171 = vld [vmem:[%s161 + $0x24] sm:$0xf]
        %v172 = vld [vmem:[%s161 + $0x28] sm:$0xf]
        %v173 = vld [vmem:[%s161 + $0x2c] sm:$0x1]
        %v174 = vld [vmem:[%s161 + $0x30] sm:$0xf]
        %v175 = vld [vmem:[%s161 + $0x34] sm:$0xf]
        %v176 = vld [vmem:[%s161 + $0x38] sm:$0x1]
        %v177 = vld [vmem:[%s161 + $0x3c] sm:$0xf]
        %v178 = vld [vmem:[%s161 + $0x40] sm:$0xf]
        %v179 = vld [vmem:[%s161 + $0x44] sm:$0x1]
        %v180 = vld [vmem:[%s161 + $0x48] sm:$0xf]
        %v181 = vld [vmem:[%s161 + $0x4c] sm:$0xf]
        %v182 = vld [vmem:[%s161 + $0x50] sm:$0x1]
        %v183 = vld [vmem:[%s161 + $0x54] sm:$0xf]
        %v184 = vld [vmem:[%s161 + $0x58] sm:$0xf]
        %v185 = vld [vmem:[%s161 + $0x5c] sm:$0x1]
        %v186 = vld [vmem:[%s161 + $0x60] sm:$0xf]
        %v187 = vld [vmem:[%s161 + $0x64] sm:$0xf]
        %v188 = vld [vmem:[%s161 + $0x68] sm:$0x1]
        %v189 = vld [vmem:[%s161 + $0x6c] sm:$0xf]
        %v190 = vld [vmem:[%s161 + $0x70] sm:$0xf]
        %v191 = vld [vmem:[%s161 + $0x74] sm:$0x1]
        %v192 = vld [vmem:[%s161 + $0x78] sm:$0xf]
        %v193 = vld [vmem:[%s161 + $0x7c] sm:$0xf]
        %v194 = vld [vmem:[%s161 + $0x80] sm:$0x1]
        %v195 = vld [vmem:[%s161 + $0x84] sm:$0xf]
        %v196 = vld [vmem:[%s161 + $0x88] sm:$0xf]
        %v197 = vld [vmem:[%s161 + $0x8c] sm:$0x1]
        %v198 = vld [vmem:[%s161 + $0x90] sm:$0xf]
        %v199 = vld [vmem:[%s161 + $0x94] sm:$0xf]
        %v200 = vld [vmem:[%s161 + $0x98] sm:$0x1]
        %v201 = vld [vmem:[%s161 + $0x9c] sm:$0xf]
        %v202 = vld [vmem:[%s161 + $0xa0] sm:$0xf]
        %v203 = vld [vmem:[%s161 + $0xa4] sm:$0x1]
        %v204 = vld [vmem:[%s161 + $0xa8] sm:$0xf]
        %v205 = vld [vmem:[%s161 + $0xac] sm:$0xf]
        %v206 = vld [vmem:[%s161 + $0xb0] sm:$0x1]
        %v207 = vld [vmem:[%s161 + $0xb4] sm:$0xf]
        %v208 = vld [vmem:[%s161 + $0xb8] sm:$0xf]
        %v209 = vld [vmem:[%s161 + $0xbc] sm:$0x1]
        %v210 = vld [vmem:[%s161 + $0xc0] sm:$0xf]
        %v211 = vld [vmem:[%s161 + $0xc4] sm:$0xf]
        %v212 = vld [vmem:[%s161 + $0xc8] sm:$0x1]
        %v213 = vld [vmem:[%s161 + $0xcc] sm:$0xf]
        %v214 = vld [vmem:[%s161 + $0xd0] sm:$0xf]
        %v215 = vld [vmem:[%s161 + $0xd4] sm:$0x1]
        %v248 = vunpack.c.l.b16 %v162
        %v249 = vunpack.c.l.b16 %v163
        %v250 = vunpack.c.l.b16 %v165
        %v251 = vunpack.c.l.b16 %v166
        %v252 = vunpack.c.l.b16 %v168
        %v253 = vunpack.c.l.b16 %v169
        %v254 = vunpack.c.l.b16 %v171
        %v255 = vunpack.c.l.b16 %v172
        %v256 = vunpack.c.l.b16 %v174
        %v257 = vunpack.c.l.b16 %v175
        %v258 = vunpack.c.l.b16 %v177
        %v259 = vunpack.c.l.b16 %v178
        %v260 = vunpack.c.l.b16 %v180
        %v261 = vunpack.c.l.b16 %v181
        %v262 = vunpack.c.l.b16 %v183
        %v263 = vunpack.c.l.b16 %v184
        %v264 = vunpack.c.l.b16 %v186
        %v265 = vunpack.c.l.b16 %v187
        %v266 = vunpack.c.l.b16 %v189
        %v267 = vunpack.c.l.b16 %v190
        %v268 = vunpack.c.l.b16 %v192
        %v269 = vunpack.c.l.b16 %v193
        %v270 = vunpack.c.l.b16 %v195
        %v271 = vunpack.c.l.b16 %v196
        %v272 = vunpack.c.l.b16 %v198
        %v273 = vunpack.c.l.b16 %v199
        %v274 = vunpack.c.l.b16 %v201
        %v275 = vunpack.c.l.b16 %v202
        %v276 = vunpack.c.l.b16 %v204
        %v277 = vunpack.c.l.b16 %v205
        %v278 = vunpack.c.l.b16 %v207
        %v279 = vunpack.c.l.b16 %v208
        %v280 = vpack.c.b16 %v249, %v248
        %v281 = vpack.c.b16 %v251, %v250
        %v282 = vpack.c.b16 %v253, %v252
        %v283 = vpack.c.b16 %v255, %v254
        %v284 = vpack.c.b16 %v257, %v256
        %v285 = vpack.c.b16 %v259, %v258
        %v286 = vpack.c.b16 %v261, %v260
        %v287 = vpack.c.b16 %v263, %v262
        %v288 = vpack.c.b16 %v265, %v264
        %v289 = vpack.c.b16 %v267, %v266
        %v290 = vpack.c.b16 %v269, %v268
        %v291 = vpack.c.b16 %v271, %v270
        %v292 = vpack.c.b16 %v273, %v272
        %v293 = vpack.c.b16 %v275, %v274
        %v294 = vpack.c.b16 %v277, %v276
        %v295 = vpack.c.b16 %v279, %v278
        %v312 = vunpack.c.l.b16 %v164
        %v313 = vunpack.c.l.b16 %v167
        %v314 = vunpack.c.l.b16 %v170
        %v315 = vunpack.c.l.b16 %v173
        %v316 = vunpack.c.l.b16 %v176
        %v317 = vunpack.c.l.b16 %v179
        %v318 = vunpack.c.l.b16 %v182
        %v319 = vunpack.c.l.b16 %v185
        %v320 = vunpack.c.l.b16 %v188
        %v321 = vunpack.c.l.b16 %v191
        %v322 = vunpack.c.l.b16 %v194
        %v323 = vunpack.c.l.b16 %v197
        %v324 = vunpack.c.l.b16 %v200
        %v325 = vunpack.c.l.b16 %v203
        %v326 = vunpack.c.l.b16 %v206
        %v327 = vunpack.c.l.b16 %v209
        %v328 = vpack.c.b16 %v312, %v312
        %v329 = vpack.c.b16 %v313, %v313
        %v330 = vpack.c.b16 %v314, %v314
        %v331 = vpack.c.b16 %v315, %v315
        %v332 = vpack.c.b16 %v316, %v316
        %v333 = vpack.c.b16 %v317, %v317
        %v334 = vpack.c.b16 %v318, %v318
        %v335 = vpack.c.b16 %v319, %v319
        %v336 = vpack.c.b16 %v320, %v320
        %v337 = vpack.c.b16 %v321, %v321
        %v338 = vpack.c.b16 %v322, %v322
        %v339 = vpack.c.b16 %v323, %v323
        %v340 = vpack.c.b16 %v324, %v324
        %v341 = vpack.c.b16 %v325, %v325
        %v342 = vpack.c.b16 %v326, %v326
        %v343 = vpack.c.b16 %v327, %v327
        %vm344 = vsmask.f32 7424
        %v346 = vshrl.u32 %v280, 16
        %v348 = vshll.u32 %v280, 16
        %v350 = vrot.slane %v348, 1
        %v351 = vor.u32 %v346, %v350
        %v353 = vshll.u32 %v328, 16
        %v355 = vrot.slane %v353, 1
        %v356 = vsel %vm344, %v351, %v355
        %v358 = vshrl.u32 %v281, 16
        %v360 = vshll.u32 %v281, 16
        %v362 = vrot.slane %v360, 1
        %v363 = vor.u32 %v358, %v362
        %v365 = vshll.u32 %v329, 16
        %v367 = vrot.slane %v365, 1
        %v368 = vsel %vm344, %v363, %v367
        %v370 = vshrl.u32 %v282, 16
        %v372 = vshll.u32 %v282, 16
        %v374 = vrot.slane %v372, 1
        %v375 = vor.u32 %v370, %v374
        %v377 = vshll.u32 %v330, 16
        %v379 = vrot.slane %v377, 1
        %v380 = vsel %vm344, %v375, %v379
        %v382 = vshrl.u32 %v283, 16
        %v384 = vshll.u32 %v283, 16
        %v386 = vrot.slane %v384, 1
        %v387 = vor.u32 %v382, %v386
        %v389 = vshll.u32 %v331, 16
        %v391 = vrot.slane %v389, 1
        %v392 = vsel %vm344, %v387, %v391
        %v394 = vshrl.u32 %v284, 16
        %v396 = vshll.u32 %v284, 16
        %v398 = vrot.slane %v396, 1
        %v399 = vor.u32 %v394, %v398
        %v401 = vshll.u32 %v332, 16
        %v403 = vrot.slane %v401, 1
        %v404 = vsel %vm344, %v399, %v403
        %v406 = vshrl.u32 %v285, 16
        %v408 = vshll.u32 %v285, 16
        %v410 = vrot.slane %v408, 1
        %v411 = vor.u32 %v406, %v410
        %v413 = vshll.u32 %v333, 16
        %v415 = vrot.slane %v413, 1
        %v416 = vsel %vm344, %v411, %v415
        %v418 = vshrl.u32 %v286, 16
        %v420 = vshll.u32 %v286, 16
        %v422 = vrot.slane %v420, 1
        %v423 = vor.u32 %v418, %v422
        %v425 = vshll.u32 %v334, 16
        %v427 = vrot.slane %v425, 1
        %v428 = vsel %vm344, %v423, %v427
        %v430 = vshrl.u32 %v287, 16
        %v432 = vshll.u32 %v287, 16
        %v434 = vrot.slane %v432, 1
        %v435 = vor.u32 %v430, %v434
        %v437 = vshll.u32 %v335, 16
        %v439 = vrot.slane %v437, 1
        %v440 = vsel %vm344, %v435, %v439
        %v442 = vshrl.u32 %v288, 16
        %v444 = vshll.u32 %v288, 16
        %v446 = vrot.slane %v444, 1
        %v447 = vor.u32 %v442, %v446
        %v449 = vshll.u32 %v336, 16
        %v451 = vrot.slane %v449, 1
        %v452 = vsel %vm344, %v447, %v451
        %v454 = vshrl.u32 %v289, 16
        %v456 = vshll.u32 %v289, 16
        %v458 = vrot.slane %v456, 1
        %v459 = vor.u32 %v454, %v458
        %v461 = vshll.u32 %v337, 16
        %v463 = vrot.slane %v461, 1
        %v464 = vsel %vm344, %v459, %v463
        %v466 = vshrl.u32 %v290, 16
        %v468 = vshll.u32 %v290, 16
        %v470 = vrot.slane %v468, 1
        %v471 = vor.u32 %v466, %v470
        %v473 = vshll.u32 %v338, 16
        %v475 = vrot.slane %v473, 1
        %v476 = vsel %vm344, %v471, %v475
        %v478 = vshrl.u32 %v291, 16
        %v480 = vshll.u32 %v291, 16
        %v482 = vrot.slane %v480, 1
        %v483 = vor.u32 %v478, %v482
        %v485 = vshll.u32 %v339, 16
        %v487 = vrot.slane %v485, 1
        %v488 = vsel %vm344, %v483, %v487
        %v490 = vshrl.u32 %v292, 16
        %v492 = vshll.u32 %v292, 16
        %v494 = vrot.slane %v492, 1
        %v495 = vor.u32 %v490, %v494
        %v497 = vshll.u32 %v340, 16
        %v499 = vrot.slane %v497, 1
        %v500 = vsel %vm344, %v495, %v499
        %v502 = vshrl.u32 %v293, 16
        %v504 = vshll.u32 %v293, 16
        %v506 = vrot.slane %v504, 1
        %v507 = vor.u32 %v502, %v506
        %v509 = vshll.u32 %v341, 16
        %v511 = vrot.slane %v509, 1
        %v512 = vsel %vm344, %v507, %v511
        %v514 = vshrl.u32 %v294, 16
        %v516 = vshll.u32 %v294, 16
        %v518 = vrot.slane %v516, 1
        %v519 = vor.u32 %v514, %v518
        %v521 = vshll.u32 %v342, 16
        %v523 = vrot.slane %v521, 1
        %v524 = vsel %vm344, %v519, %v523
        %v526 = vshrl.u32 %v295, 16
        %v528 = vshll.u32 %v295, 16
        %v530 = vrot.slane %v528, 1
        %v531 = vor.u32 %v526, %v530
        %v533 = vshll.u32 %v343, 16
        %v535 = vrot.slane %v533, 1
        %v536 = vsel %vm344, %v531, %v535
        %537 = vrot.lane.b32.xlu0 %v356, 4
        %v538 = vpop.permute.xlu0 %537
        %539 = vrot.lane.b32.xlu0 %v368, 4
        %v540 = vpop.permute.xlu0 %539
        %541 = vrot.lane.b32.xlu0 %v380, 4
        %v542 = vpop.permute.xlu0 %541
        %543 = vrot.lane.b32.xlu0 %v392, 4
        %v544 = vpop.permute.xlu0 %543
        %545 = vrot.lane.b32.xlu0 %v404, 4
        %v546 = vpop.permute.xlu0 %545
        %547 = vrot.lane.b32.xlu0 %v416, 4
        %v548 = vpop.permute.xlu0 %547
        %549 = vrot.lane.b32.xlu0 %v428, 4
        %v550 = vpop.permute.xlu0 %549
        %551 = vrot.lane.b32.xlu0 %v440, 4
        %v552 = vpop.permute.xlu0 %551
        %553 = vrot.lane.b32.xlu0 %v452, 4
        %v554 = vpop.permute.xlu0 %553
        %555 = vrot.lane.b32.xlu0 %v464, 4
        %v556 = vpop.permute.xlu0 %555
        %557 = vrot.lane.b32.xlu0 %v476, 4
        %v558 = vpop.permute.xlu0 %557
        %559 = vrot.lane.b32.xlu0 %v488, 4
        %v560 = vpop.permute.xlu0 %559
        %561 = vrot.lane.b32.xlu0 %v500, 4
        %v562 = vpop.permute.xlu0 %561
        %563 = vrot.lane.b32.xlu0 %v512, 4
        %v564 = vpop.permute.xlu0 %563
        %565 = vrot.lane.b32.xlu0 %v524, 4
        %v566 = vpop.permute.xlu0 %565
        %567 = vrot.lane.b32.xlu0 %v536, 4
        %v568 = vpop.permute.xlu0 %567
        %vm569 = vcmask 1046528
        %v570 = vrot.slane %v280, 1
        %v571 = vrot.slane %v328, 1
        %v572 = vsel %vm569, %v570, %v571
        %v573 = vrot.slane %v281, 1
        %v574 = vrot.slane %v329, 1
        %v575 = vsel %vm569, %v573, %v574
        %v576 = vrot.slane %v282, 1
        %v577 = vrot.slane %v330, 1
        %v578 = vsel %vm569, %v576, %v577
        %v579 = vrot.slane %v283, 1
        %v580 = vrot.slane %v331, 1
        %v581 = vsel %vm569, %v579, %v580
        %v582 = vrot.slane %v284, 1
        %v583 = vrot.slane %v332, 1
        %v584 = vsel %vm569, %v582, %v583
        %v585 = vrot.slane %v285, 1
        %v586 = vrot.slane %v333, 1
        %v587 = vsel %vm569, %v585, %v586
        %v588 = vrot.slane %v286, 1
        %v589 = vrot.slane %v334, 1
        %v590 = vsel %vm569, %v588, %v589
        %v591 = vrot.slane %v287, 1
        %v592 = vrot.slane %v335, 1
        %v593 = vsel %vm569, %v591, %v592
        %v594 = vrot.slane %v288, 1
        %v595 = vrot.slane %v336, 1
        %v596 = vsel %vm569, %v594, %v595
        %v597 = vrot.slane %v289, 1
        %v598 = vrot.slane %v337, 1
        %v599 = vsel %vm569, %v597, %v598
        %v600 = vrot.slane %v290, 1
        %v601 = vrot.slane %v338, 1
        %v602 = vsel %vm569, %v600, %v601
        %v603 = vrot.slane %v291, 1
        %v604 = vrot.slane %v339, 1
        %v605 = vsel %vm569, %v603, %v604
        %v606 = vrot.slane %v292, 1
        %v607 = vrot.slane %v340, 1
        %v608 = vsel %vm569, %v606, %v607
        %v609 = vrot.slane %v293, 1
        %v610 = vrot.slane %v341, 1
        %v611 = vsel %vm569, %v609, %v610
        %v612 = vrot.slane %v294, 1
        %v613 = vrot.slane %v342, 1
        %v614 = vsel %vm569, %v612, %v613
        %v615 = vrot.slane %v295, 1
        %v616 = vrot.slane %v343, 1
        %v617 = vsel %vm569, %v615, %v616
        %618 = vrot.lane.b32.xlu0 %v572, 8
        %v619 = vpop.permute.xlu0 %618
        %620 = vrot.lane.b32.xlu0 %v575, 8
        %v621 = vpop.permute.xlu0 %620
        %622 = vrot.lane.b32.xlu0 %v578, 8
        %v623 = vpop.permute.xlu0 %622
        %624 = vrot.lane.b32.xlu0 %v581, 8
        %v625 = vpop.permute.xlu0 %624
        %626 = vrot.lane.b32.xlu0 %v584, 8
        %v627 = vpop.permute.xlu0 %626
        %628 = vrot.lane.b32.xlu0 %v587, 8
        %v629 = vpop.permute.xlu0 %628
        %630 = vrot.lane.b32.xlu0 %v590, 8
        %v631 = vpop.permute.xlu0 %630
        %632 = vrot.lane.b32.xlu0 %v593, 8
        %v633 = vpop.permute.xlu0 %632
        %634 = vrot.lane.b32.xlu0 %v596, 8
        %v635 = vpop.permute.xlu0 %634
        %636 = vrot.lane.b32.xlu0 %v599, 8
        %v637 = vpop.permute.xlu0 %636
        %638 = vrot.lane.b32.xlu0 %v602, 8
        %v639 = vpop.permute.xlu0 %638
        %640 = vrot.lane.b32.xlu0 %v605, 8
        %v641 = vpop.permute.xlu0 %640
        %642 = vrot.lane.b32.xlu0 %v608, 8
        %v643 = vpop.permute.xlu0 %642
        %644 = vrot.lane.b32.xlu0 %v611, 8
        %v645 = vpop.permute.xlu0 %644
        %646 = vrot.lane.b32.xlu0 %v614, 8
        %v647 = vpop.permute.xlu0 %646
        %648 = vrot.lane.b32.xlu0 %v617, 8
        %v649 = vpop.permute.xlu0 %648
        %v652 = vunpack.c.l.b16 %v210
        %v653 = vunpack.c.l.b16 %v211
        %v654 = vpack.c.b16 %v653, %v652
        %655 = vrot.lane.b32.xlu0 %v281, 12
        %v656 = vpop.permute.xlu0 %655
        %657 = vrot.lane.b32.xlu0 %v282, 12
        %v658 = vpop.permute.xlu0 %657
        %659 = vrot.lane.b32.xlu0 %v283, 12
        %v660 = vpop.permute.xlu0 %659
        %661 = vrot.lane.b32.xlu0 %v284, 12
        %v662 = vpop.permute.xlu0 %661
        %663 = vrot.lane.b32.xlu0 %v285, 12
        %v664 = vpop.permute.xlu0 %663
        %665 = vrot.lane.b32.xlu0 %v286, 12
        %v666 = vpop.permute.xlu0 %665
        %667 = vrot.lane.b32.xlu0 %v287, 12
        %v668 = vpop.permute.xlu0 %667
        %669 = vrot.lane.b32.xlu0 %v288, 12
        %v670 = vpop.permute.xlu0 %669
        %671 = vrot.lane.b32.xlu0 %v289, 12
        %v672 = vpop.permute.xlu0 %671
        %673 = vrot.lane.b32.xlu0 %v290, 12
        %v674 = vpop.permute.xlu0 %673
        %675 = vrot.lane.b32.xlu0 %v291, 12
        %v676 = vpop.permute.xlu0 %675
        %677 = vrot.lane.b32.xlu0 %v292, 12
        %v678 = vpop.permute.xlu0 %677
        %679 = vrot.lane.b32.xlu0 %v293, 12
        %v680 = vpop.permute.xlu0 %679
        %681 = vrot.lane.b32.xlu0 %v294, 12
        %v682 = vpop.permute.xlu0 %681
        %683 = vrot.lane.b32.xlu0 %v295, 12
        %v684 = vpop.permute.xlu0 %683
        %685 = vrot.lane.b32.xlu0 %v654, 12
        %v686 = vpop.permute.xlu0 %685
        %v688 = vunpack.c.l.b16 %v212
        %v689 = vpack.c.b16 %v688, %v688
        %v691 = vshrl.u32 %v654, 16
        %v693 = vshll.u32 %v654, 16
        %v695 = vrot.slane %v693, 1
        %v696 = vor.u32 %v691, %v695
        %v698 = vshll.u32 %v689, 16
        %v700 = vrot.slane %v698, 1
        %v701 = vsel %vm344, %v696, %v700
        %702 = vrot.lane.b32.xlu0 %v368, 16
        %v703 = vpop.permute.xlu0 %702
        %704 = vrot.lane.b32.xlu0 %v380, 16
        %v705 = vpop.permute.xlu0 %704
        %706 = vrot.lane.b32.xlu0 %v392, 16
        %v707 = vpop.permute.xlu0 %706
        %708 = vrot.lane.b32.xlu0 %v404, 16
        %v709 = vpop.permute.xlu0 %708
        %710 = vrot.lane.b32.xlu0 %v416, 16
        %v711 = vpop.permute.xlu0 %710
        %712 = vrot.lane.b32.xlu0 %v428, 16
        %v713 = vpop.permute.xlu0 %712
        %714 = vrot.lane.b32.xlu0 %v440, 16
        %v715 = vpop.permute.xlu0 %714
        %716 = vrot.lane.b32.xlu0 %v452, 16
        %v717 = vpop.permute.xlu0 %716
        %718 = vrot.lane.b32.xlu0 %v464, 16
        %v719 = vpop.permute.xlu0 %718
        %720 = vrot.lane.b32.xlu0 %v476, 16
        %v721 = vpop.permute.xlu0 %720
        %722 = vrot.lane.b32.xlu0 %v488, 16
        %v723 = vpop.permute.xlu0 %722
        %724 = vrot.lane.b32.xlu0 %v500, 16
        %v725 = vpop.permute.xlu0 %724
        %726 = vrot.lane.b32.xlu0 %v512, 16
        %v727 = vpop.permute.xlu0 %726
        %728 = vrot.lane.b32.xlu0 %v524, 16
        %v729 = vpop.permute.xlu0 %728
        %730 = vrot.lane.b32.xlu0 %v536, 16
        %v731 = vpop.permute.xlu0 %730
        %732 = vrot.lane.b32.xlu0 %v701, 16
        %v733 = vpop.permute.xlu0 %732
        %v734 = vrot.slane %v654, 1
        %v735 = vrot.slane %v689, 1
        %v736 = vsel %vm569, %v734, %v735
        %737 = vrot.lane.b32.xlu0 %v575, 20
        %v738 = vpop.permute.xlu0 %737
        %739 = vrot.lane.b32.xlu0 %v578, 20
        %v740 = vpop.permute.xlu0 %739
        %741 = vrot.lane.b32.xlu0 %v581, 20
        %v742 = vpop.permute.xlu0 %741
        %743 = vrot.lane.b32.xlu0 %v584, 20
        %v744 = vpop.permute.xlu0 %743
        %745 = vrot.lane.b32.xlu0 %v587, 20
        %v746 = vpop.permute.xlu0 %745
        %747 = vrot.lane.b32.xlu0 %v590, 20
        %v748 = vpop.permute.xlu0 %747
        %749 = vrot.lane.b32.xlu0 %v593, 20
        %v750 = vpop.permute.xlu0 %749
        %751 = vrot.lane.b32.xlu0 %v596, 20
        %v752 = vpop.permute.xlu0 %751
        %753 = vrot.lane.b32.xlu0 %v599, 20
        %v754 = vpop.permute.xlu0 %753
        %755 = vrot.lane.b32.xlu0 %v602, 20
        %v756 = vpop.permute.xlu0 %755
        %757 = vrot.lane.b32.xlu0 %v605, 20
        %v758 = vpop.permute.xlu0 %757
        %759 = vrot.lane.b32.xlu0 %v608, 20
        %v760 = vpop.permute.xlu0 %759
        %761 = vrot.lane.b32.xlu0 %v611, 20
        %v762 = vpop.permute.xlu0 %761
        %763 = vrot.lane.b32.xlu0 %v614, 20
        %v764 = vpop.permute.xlu0 %763
        %765 = vrot.lane.b32.xlu0 %v617, 20
        %v766 = vpop.permute.xlu0 %765
        %767 = vrot.lane.b32.xlu0 %v736, 20
        %v768 = vpop.permute.xlu0 %767
        %v771 = vunpack.c.l.b16 %v213
        %v772 = vunpack.c.l.b16 %v214
        %v773 = vpack.c.b16 %v772, %v771
        %774 = vrot.lane.b32.xlu0 %v282, 24
        %v775 = vpop.permute.xlu0 %774
        %776 = vrot.lane.b32.xlu0 %v283, 24
        %v777 = vpop.permute.xlu0 %776
        %778 = vrot.lane.b32.xlu0 %v284, 24
        %v779 = vpop.permute.xlu0 %778
        %780 = vrot.lane.b32.xlu0 %v285, 24
        %v781 = vpop.permute.xlu0 %780
        %782 = vrot.lane.b32.xlu0 %v286, 24
        %v783 = vpop.permute.xlu0 %782
        %784 = vrot.lane.b32.xlu0 %v287, 24
        %v785 = vpop.permute.xlu0 %784
        %786 = vrot.lane.b32.xlu0 %v288, 24
        %v787 = vpop.permute.xlu0 %786
        %788 = vrot.lane.b32.xlu0 %v289, 24
        %v789 = vpop.permute.xlu0 %788
        %790 = vrot.lane.b32.xlu0 %v290, 24
        %v791 = vpop.permute.xlu0 %790
        %792 = vrot.lane.b32.xlu0 %v291, 24
        %v793 = vpop.permute.xlu0 %792
        %794 = vrot.lane.b32.xlu0 %v292, 24
        %v795 = vpop.permute.xlu0 %794
        %796 = vrot.lane.b32.xlu0 %v293, 24
        %v797 = vpop.permute.xlu0 %796
        %798 = vrot.lane.b32.xlu0 %v294, 24
        %v799 = vpop.permute.xlu0 %798
        %800 = vrot.lane.b32.xlu0 %v295, 24
        %v801 = vpop.permute.xlu0 %800
        %802 = vrot.lane.b32.xlu0 %v654, 24
        %v803 = vpop.permute.xlu0 %802
        %804 = vrot.lane.b32.xlu0 %v773, 24
        %v805 = vpop.permute.xlu0 %804
        %v807 = vunpack.c.l.b16 %v215
        %v808 = vpack.c.b16 %v807, %v807
        %v810 = vshrl.u32 %v773, 16
        %v812 = vshll.u32 %v773, 16
        %v814 = vrot.slane %v812, 1
        %v815 = vor.u32 %v810, %v814
        %v817 = vshll.u32 %v808, 16
        %v819 = vrot.slane %v817, 1
        %v820 = vsel %vm344, %v815, %v819
        %821 = vrot.lane.b32.xlu0 %v380, 28
        %v822 = vpop.permute.xlu0 %821
        %823 = vrot.lane.b32.xlu0 %v392, 28
        %v824 = vpop.permute.xlu0 %823
        %825 = vrot.lane.b32.xlu0 %v404, 28
        %v826 = vpop.permute.xlu0 %825
        %827 = vrot.lane.b32.xlu0 %v416, 28
        %v828 = vpop.permute.xlu0 %827
        %829 = vrot.lane.b32.xlu0 %v428, 28
        %v830 = vpop.permute.xlu0 %829
        %831 = vrot.lane.b32.xlu0 %v440, 28
        %v832 = vpop.permute.xlu0 %831
        %833 = vrot.lane.b32.xlu0 %v452, 28
        %v834 = vpop.permute.xlu0 %833
        %835 = vrot.lane.b32.xlu0 %v464, 28
        %v836 = vpop.permute.xlu0 %835
        %837 = vrot.lane.b32.xlu0 %v476, 28
        %v838 = vpop.permute.xlu0 %837
        %839 = vrot.lane.b32.xlu0 %v488, 28
        %v840 = vpop.permute.xlu0 %839
        %841 = vrot.lane.b32.xlu0 %v500, 28
        %v842 = vpop.permute.xlu0 %841
        %843 = vrot.lane.b32.xlu0 %v512, 28
        %v844 = vpop.permute.xlu0 %843
        %845 = vrot.lane.b32.xlu0 %v524, 28
        %v846 = vpop.permute.xlu0 %845
        %847 = vrot.lane.b32.xlu0 %v536, 28
        %v848 = vpop.permute.xlu0 %847
        %849 = vrot.lane.b32.xlu0 %v701, 28
        %v850 = vpop.permute.xlu0 %849
        %851 = vrot.lane.b32.xlu0 %v820, 28
        %v852 = vpop.permute.xlu0 %851
        %v853 = vrot.slane %v773, 1
        %v854 = vrot.slane %v808, 1
        %v855 = vsel %vm569, %v853, %v854
        %856 = vrot.lane.b32.xlu0 %v578, 32
        %v857 = vpop.permute.xlu0 %856
        %858 = vrot.lane.b32.xlu0 %v581, 32
        %v859 = vpop.permute.xlu0 %858
        %860 = vrot.lane.b32.xlu0 %v584, 32
        %v861 = vpop.permute.xlu0 %860
        %862 = vrot.lane.b32.xlu0 %v587, 32
        %v863 = vpop.permute.xlu0 %862
        %864 = vrot.lane.b32.xlu0 %v590, 32
        %v865 = vpop.permute.xlu0 %864
        %866 = vrot.lane.b32.xlu0 %v593, 32
        %v867 = vpop.permute.xlu0 %866
        %868 = vrot.lane.b32.xlu0 %v596, 32
        %v869 = vpop.permute.xlu0 %868
        %870 = vrot.lane.b32.xlu0 %v599, 32
        %v871 = vpop.permute.xlu0 %870
        %872 = vrot.lane.b32.xlu0 %v602, 32
        %v873 = vpop.permute.xlu0 %872
        %874 = vrot.lane.b32.xlu0 %v605, 32
        %v875 = vpop.permute.xlu0 %874
        %876 = vrot.lane.b32.xlu0 %v608, 32
        %v877 = vpop.permute.xlu0 %876
        %878 = vrot.lane.b32.xlu0 %v611, 32
        %v879 = vpop.permute.xlu0 %878
        %880 = vrot.lane.b32.xlu0 %v614, 32
        %v881 = vpop.permute.xlu0 %880
        %882 = vrot.lane.b32.xlu0 %v617, 32
        %v883 = vpop.permute.xlu0 %882
        %884 = vrot.lane.b32.xlu0 %v736, 32
        %v885 = vpop.permute.xlu0 %884
        %886 = vrot.lane.b32.xlu0 %v855, 32
        %v887 = vpop.permute.xlu0 %886
        %vm888 = vcmask 31744
        %v890 = vsel %vm888, %v280, %v538
        %v892 = vsel %vm888, %v281, %v540
        %v894 = vsel %vm888, %v282, %v542
        %v896 = vsel %vm888, %v283, %v544
        %v898 = vsel %vm888, %v284, %v546
        %v900 = vsel %vm888, %v285, %v548
        %v902 = vsel %vm888, %v286, %v550
        %v904 = vsel %vm888, %v287, %v552
        %v906 = vsel %vm888, %v288, %v554
        %v908 = vsel %vm888, %v289, %v556
        %v910 = vsel %vm888, %v290, %v558
        %v912 = vsel %vm888, %v291, %v560
        %v914 = vsel %vm888, %v292, %v562
        %v916 = vsel %vm888, %v293, %v564
        %v918 = vsel %vm888, %v294, %v566
        %v920 = vsel %vm888, %v295, %v568
        %vm921 = vcmask 64512
        %v923 = vsel %vm921, %v890, %v619
        %v925 = vsel %vm921, %v892, %v621
        %v927 = vsel %vm921, %v894, %v623
        %v929 = vsel %vm921, %v896, %v625
        %v931 = vsel %vm921, %v898, %v627
        %v933 = vsel %vm921, %v900, %v629
        %v935 = vsel %vm921, %v902, %v631
        %v937 = vsel %vm921, %v904, %v633
        %v939 = vsel %vm921, %v906, %v635
        %v941 = vsel %vm921, %v908, %v637
        %v943 = vsel %vm921, %v910, %v639
        %v945 = vsel %vm921, %v912, %v641
        %v947 = vsel %vm921, %v914, %v643
        %v949 = vsel %vm921, %v916, %v645
        %v951 = vsel %vm921, %v918, %v647
        %v953 = vsel %vm921, %v920, %v649
        %vm954 = vcmask 97280
        %v956 = vsel %vm954, %v923, %v656
        %v958 = vsel %vm954, %v925, %v658
        %v960 = vsel %vm954, %v927, %v660
        %v962 = vsel %vm954, %v929, %v662
        %v964 = vsel %vm954, %v931, %v664
        %v966 = vsel %vm954, %v933, %v666
        %v968 = vsel %vm954, %v935, %v668
        %v970 = vsel %vm954, %v937, %v670
        %v972 = vsel %vm954, %v939, %v672
        %v974 = vsel %vm954, %v941, %v674
        %v976 = vsel %vm954, %v943, %v676
        %v978 = vsel %vm954, %v945, %v678
        %v980 = vsel %vm954, %v947, %v680
        %v982 = vsel %vm954, %v949, %v682
        %v984 = vsel %vm954, %v951, %v684
        %v986 = vsel %vm954, %v953, %v686
        %vm987 = vcmask 130048
        %v989 = vsel %vm987, %v956, %v703
        %v991 = vsel %vm987, %v958, %v705
        %v993 = vsel %vm987, %v960, %v707
        %v995 = vsel %vm987, %v962, %v709
        %v997 = vsel %vm987, %v964, %v711
        %v999 = vsel %vm987, %v966, %v713
        %v1001 = vsel %vm987, %v968, %v715
        %v1003 = vsel %vm987, %v970, %v717
        %v1005 = vsel %vm987, %v972, %v719
        %v1007 = vsel %vm987, %v974, %v721
        %v1009 = vsel %vm987, %v976, %v723
        %v1011 = vsel %vm987, %v978, %v725
        %v1013 = vsel %vm987, %v980, %v727
        %v1015 = vsel %vm987, %v982, %v729
        %v1017 = vsel %vm987, %v984, %v731
        %v1019 = vsel %vm987, %v986, %v733
        %vm1020 = vcmask 162816
        %v1022 = vsel %vm1020, %v989, %v738
        %v1024 = vsel %vm1020, %v991, %v740
        %v1026 = vsel %vm1020, %v993, %v742
        %v1028 = vsel %vm1020, %v995, %v744
        %v1030 = vsel %vm1020, %v997, %v746
        %v1032 = vsel %vm1020, %v999, %v748
        %v1034 = vsel %vm1020, %v1001, %v750
        %v1036 = vsel %vm1020, %v1003, %v752
        %v1038 = vsel %vm1020, %v1005, %v754
        %v1040 = vsel %vm1020, %v1007, %v756
        %v1042 = vsel %vm1020, %v1009, %v758
        %v1044 = vsel %vm1020, %v1011, %v760
        %v1046 = vsel %vm1020, %v1013, %v762
        %v1048 = vsel %vm1020, %v1015, %v764
        %v1050 = vsel %vm1020, %v1017, %v766
        %v1052 = vsel %vm1020, %v1019, %v768
        %vm1053 = vcmask 195584
        %v1055 = vsel %vm1053, %v1022, %v775
        %v1057 = vsel %vm1053, %v1024, %v777
        %v1059 = vsel %vm1053, %v1026, %v779
        %v1061 = vsel %vm1053, %v1028, %v781
        %v1063 = vsel %vm1053, %v1030, %v783
        %v1065 = vsel %vm1053, %v1032, %v785
        %v1067 = vsel %vm1053, %v1034, %v787
        %v1069 = vsel %vm1053, %v1036, %v789
        %v1071 = vsel %vm1053, %v1038, %v791
        %v1073 = vsel %vm1053, %v1040, %v793
        %v1075 = vsel %vm1053, %v1042, %v795
        %v1077 = vsel %vm1053, %v1044, %v797
        %v1079 = vsel %vm1053, %v1046, %v799
        %v1081 = vsel %vm1053, %v1048, %v801
        %v1083 = vsel %vm1053, %v1050, %v803
        %v1085 = vsel %vm1053, %v1052, %v805
        %vm1086 = vcmask 228352
        %v1088 = vsel %vm1086, %v1055, %v822
        %v1090 = vsel %vm1086, %v1057, %v824
        %v1092 = vsel %vm1086, %v1059, %v826
        %v1094 = vsel %vm1086, %v1061, %v828
        %v1096 = vsel %vm1086, %v1063, %v830
        %v1098 = vsel %vm1086, %v1065, %v832
        %v1100 = vsel %vm1086, %v1067, %v834
        %v1102 = vsel %vm1086, %v1069, %v836
        %v1104 = vsel %vm1086, %v1071, %v838
        %v1106 = vsel %vm1086, %v1073, %v840
        %v1108 = vsel %vm1086, %v1075, %v842
        %v1110 = vsel %vm1086, %v1077, %v844
        %v1112 = vsel %vm1086, %v1079, %v846
        %v1114 = vsel %vm1086, %v1081, %v848
        %v1116 = vsel %vm1086, %v1083, %v850
        %v1118 = vsel %vm1086, %v1085, %v852
        %vm1119 = vcmask 261120
        %v1121 = vsel %vm1119, %v1088, %v857
        %v1123 = vsel %vm1119, %v1090, %v859
        %v1125 = vsel %vm1119, %v1092, %v861
        %v1127 = vsel %vm1119, %v1094, %v863
        %v1129 = vsel %vm1119, %v1096, %v865
        %v1131 = vsel %vm1119, %v1098, %v867
        %v1133 = vsel %vm1119, %v1100, %v869
        %v1135 = vsel %vm1119, %v1102, %v871
        %v1137 = vsel %vm1119, %v1104, %v873
        %v1139 = vsel %vm1119, %v1106, %v875
        %v1141 = vsel %vm1119, %v1108, %v877
        %v1143 = vsel %vm1119, %v1110, %v879
        %v1145 = vsel %vm1119, %v1112, %v881
        %v1147 = vsel %vm1119, %v1114, %v883
        %v1149 = vsel %vm1119, %v1116, %v885
        %v1151 = vsel %vm1119, %v1118, %v887
        %v1152 = vld [vmem:[%s1] sm:$0xf]
        %v1153 = vld [vmem:[%s1 + $0x4] sm:$0xf]
        %v1154 = vld [vmem:[%s1 + $0x8] sm:$0xf]
        %v1155 = vld [vmem:[%s1 + $0xc] sm:$0xf]
        %v1156 = vld [vmem:[%s1 + $0x10] sm:$0x3]
        %v1162 = vunpack.c.l.b16 %v1152
        %v1163 = vunpack.c.l.b16 %v1153
        %v1164 = vunpack.c.l.b16 %v1154
        %v1165 = vunpack.c.l.b16 %v1155
        %v1166 = vunpack.c.l.b16 %v1156
        %v1167 = vpack.c.b16 %v1163, %v1162
        %v1168 = vpack.c.b16 %v1165, %v1164
        %v1169 = vpack.c.b16 %v1166, %v1166
        %vm1172 = vcmask 293888
        %v1173 = vsel %vm1172, %v1121, 0
        %v1175 = vsel %vm1172, %v1123, 0
        %v1177 = vsel %vm1172, %v1125, 0
        %v1179 = vsel %vm1172, %v1127, 0
        %v1181 = vsel %vm1172, %v1129, 0
        %v1183 = vsel %vm1172, %v1131, 0
        %v1185 = vsel %vm1172, %v1133, 0
        %v1187 = vsel %vm1172, %v1135, 0
        %v1189 = vsel %vm1172, %v1137, 0
        %v1191 = vsel %vm1172, %v1139, 0
        %v1193 = vsel %vm1172, %v1141, 0
        %v1195 = vsel %vm1172, %v1143, 0
        %v1197 = vsel %vm1172, %v1145, 0
        %v1199 = vsel %vm1172, %v1147, 0
        %v1201 = vsel %vm1172, %v1149, 0
        %v1203 = vsel %vm1172, %v1151, 0
        %vm1205 = vcmask 1041408
        %v1207 = vsel %vm1205, %v1169, 0
        %1209 = vmatprep.subr.bf16.mxu0 0
        %1210 = vmatpush1.bf16.msra.mxu0 %v1167
        %1211 = vmatprep.subr.bf16.mxu0 0
        %1212 = vmatpush1.bf16.msra.mxu0 %v1168
        %1213 = vmatprep.subr.bf16.mxu0 0
        %1214 = vmatpush1.bf16.msra.mxu0 %v1207
        %1215 = vmatprep.subr.bf16.mxu0 0
        %1216 = vmatpush1.bf16.msra.mxu0 0
        %1217 = vmatprep.subr.bf16.mxu0 0
        %1218 = vmatpush1.bf16.msra.mxu0 0
        %1219 = vmatprep.subr.bf16.mxu0 0
        %1220 = vmatpush1.bf16.msra.mxu0 0
        %1221 = vmatprep.subr.bf16.mxu0 0
        %1222 = vmatpush1.bf16.msra.mxu0 0
        %1223 = vmatprep.subr.bf16.mxu0 0
        %1224 = vmatpush1.bf16.msra.mxu0 0
        %1225 = vmatprep.subr.bf16.mxu0 0
        %1226 = vmatpush1.bf16.msra.mxu0 0
        %1227 = vmatprep.subr.bf16.mxu0 0
        %1228 = vmatpush1.bf16.msra.mxu0 0
        %1229 = vmatprep.subr.bf16.mxu0 0
        %1230 = vmatpush1.bf16.msra.mxu0 0
        %1231 = vmatprep.subr.bf16.mxu0 0
        %1232 = vmatpush1.bf16.msra.mxu0 0
        %1233 = vmatprep.subr.bf16.mxu0 0
        %1234 = vmatpush1.bf16.msra.mxu0 0
        %1235 = vmatprep.subr.bf16.mxu0 0
        %1236 = vmatpush1.bf16.msra.mxu0 0
        %1237 = vmatprep.subr.bf16.mxu0 0
        %1238 = vmatpush1.bf16.msra.mxu0 0
        %1239 = vmatprep.subr.bf16.mxu0 0
        %1240 = vmatpush1.bf16.msra.mxu0 0
        %1241 = vmatprep.mubr.bf16.mxu0 0
        %1242 = vmatmul.mubr.bf16.gmra.mrb[0].mxu0 %v1173
        %v1243 = vpop.f32.mrb[0].mxu0
        %v1244 = vadd.f32 0.0, %v1243
        %v1245 = vpop.f32.mrb[0].mxu0
        %v1246 = vpop.f32.mrb[0].mxu0
        %v1247 = vadd.f32 0.0, %v1246
        %v1248 = vpop.f32.mrb[0].mxu0
        %1249 = vmatprep.mubr.bf16.mxu0 0
        %1250 = vmatmul.mubr.bf16.gmra.mrb[0].mxu0 %v1175
        %v1251 = vpop.f32.mrb[0].mxu0
        %v1252 = vadd.f32 0.0, %v1251
        %v1253 = vpop.f32.mrb[0].mxu0
        %v1254 = vpop.f32.mrb[0].mxu0
        %v1255 = vadd.f32 0.0, %v1254
        %v1256 = vpop.f32.mrb[0].mxu0
        %1257 = vmatprep.mubr.bf16.mxu0 0
        %1258 = vmatmul.mubr.bf16.gmra.mrb[0].mxu0 %v1177
        %v1259 = vpop.f32.mrb[0].mxu0
        %v1260 = vadd.f32 0.0, %v1259
        %v1261 = vpop.f32.mrb[0].mxu0
        %v1262 = vpop.f32.mrb[0].mxu0
        %v1263 = vadd.f32 0.0, %v1262
        %v1264 = vpop.f32.mrb[0].mxu0
        %1265 = vmatprep.mubr.bf16.mxu0 0
        %1266 = vmatmul.mubr.bf16.gmra.mrb[0].mxu0 %v1179
        %v1267 = vpop.f32.mrb[0].mxu0
        %v1268 = vadd.f32 0.0, %v1267
        %v1269 = vpop.f32.mrb[0].mxu0
        %v1270 = vpop.f32.mrb[0].mxu0
        %v1271 = vadd.f32 0.0, %v1270
        %v1272 = vpop.f32.mrb[0].mxu0
        %1273 = vmatprep.mubr.bf16.mxu0 0
        %1274 = vmatmul.mubr.bf16.gmra.mrb[0].mxu0 %v1181
        %v1275 = vpop.f32.mrb[0].mxu0
        %v1276 = vadd.f32 0.0, %v1275
        %v1277 = vpop.f32.mrb[0].mxu0
        %v1278 = vpop.f32.mrb[0].mxu0
        %v1279 = vadd.f32 0.0, %v1278
        %v1280 = vpop.f32.mrb[0].mxu0
        %1281 = vmatprep.mubr.bf16.mxu0 0
        %1282 = vmatmul.mubr.bf16.gmra.mrb[0].mxu0 %v1183
        %v1283 = vpop.f32.mrb[0].mxu0
        %v1284 = vadd.f32 0.0, %v1283
        %v1285 = vpop.f32.mrb[0].mxu0
        %v1286 = vpop.f32.mrb[0].mxu0
        %v1287 = vadd.f32 0.0, %v1286
        %v1288 = vpop.f32.mrb[0].mxu0
        %1289 = vmatprep.mubr.bf16.mxu0 0
        %1290 = vmatmul.mubr.bf16.gmra.mrb[0].mxu0 %v1185
        %v1291 = vpop.f32.mrb[0].mxu0
        %v1292 = vadd.f32 0.0, %v1291
        %v1293 = vpop.f32.mrb[0].mxu0
        %v1294 = vpop.f32.mrb[0].mxu0
        %v1295 = vadd.f32 0.0, %v1294
        %v1296 = vpop.f32.mrb[0].mxu0
        %1297 = vmatprep.mubr.bf16.mxu0 0
        %1298 = vmatmul.mubr.bf16.gmra.mrb[0].mxu0 %v1187
        %v1299 = vpop.f32.mrb[0].mxu0
        %v1300 = vadd.f32 0.0, %v1299
        %v1301 = vpop.f32.mrb[0].mxu0
        %v1302 = vpop.f32.mrb[0].mxu0
        %v1303 = vadd.f32 0.0, %v1302
        %v1304 = vpop.f32.mrb[0].mxu0
        %1305 = vmatprep.mubr.bf16.mxu0 0
        %1306 = vmatmul.mubr.bf16.gmra.mrb[0].mxu0 %v1189
        %v1307 = vpop.f32.mrb[0].mxu0
        %v1308 = vadd.f32 0.0, %v1307
        %v1309 = vpop.f32.mrb[0].mxu0
        %v1310 = vpop.f32.mrb[0].mxu0
        %v1311 = vadd.f32 0.0, %v1310
        %v1312 = vpop.f32.mrb[0].mxu0
        %1313 = vmatprep.mubr.bf16.mxu0 0
        %1314 = vmatmul.mubr.bf16.gmra.mrb[0].mxu0 %v1191
        %v1315 = vpop.f32.mrb[0].mxu0
        %v1316 = vadd.f32 0.0, %v1315
        %v1317 = vpop.f32.mrb[0].mxu0
        %v1318 = vpop.f32.mrb[0].mxu0
        %v1319 = vadd.f32 0.0, %v1318
        %v1320 = vpop.f32.mrb[0].mxu0
        %1321 = vmatprep.mubr.bf16.mxu0 0
        %1322 = vmatmul.mubr.bf16.gmra.mrb[0].mxu0 %v1193
        %v1323 = vpop.f32.mrb[0].mxu0
        %v1324 = vadd.f32 0.0, %v1323
        %v1325 = vpop.f32.mrb[0].mxu0
        %v1326 = vpop.f32.mrb[0].mxu0
        %v1327 = vadd.f32 0.0, %v1326
        %v1328 = vpop.f32.mrb[0].mxu0
        %1329 = vmatprep.mubr.bf16.mxu0 0
        %1330 = vmatmul.mubr.bf16.gmra.mrb[0].mxu0 %v1195
        %v1331 = vpop.f32.mrb[0].mxu0
        %v1332 = vadd.f32 0.0, %v1331
        %v1333 = vpop.f32.mrb[0].mxu0
        %v1334 = vpop.f32.mrb[0].mxu0
        %v1335 = vadd.f32 0.0, %v1334
        %v1336 = vpop.f32.mrb[0].mxu0
        %1337 = vmatprep.mubr.bf16.mxu0 0
        %1338 = vmatmul.mubr.bf16.gmra.mrb[0].mxu0 %v1197
        %v1339 = vpop.f32.mrb[0].mxu0
        %v1340 = vadd.f32 0.0, %v1339
        %v1341 = vpop.f32.mrb[0].mxu0
        %v1342 = vpop.f32.mrb[0].mxu0
        %v1343 = vadd.f32 0.0, %v1342
        %v1344 = vpop.f32.mrb[0].mxu0
        %1345 = vmatprep.mubr.bf16.mxu0 0
        %1346 = vmatmul.mubr.bf16.gmra.mrb[0].mxu0 %v1199
        %v1347 = vpop.f32.mrb[0].mxu0
        %v1348 = vadd.f32 0.0, %v1347
        %v1349 = vpop.f32.mrb[0].mxu0
        %v1350 = vpop.f32.mrb[0].mxu0
        %v1351 = vadd.f32 0.0, %v1350
        %v1352 = vpop.f32.mrb[0].mxu0
        %1353 = vmatprep.mubr.bf16.mxu0 0
        %1354 = vmatmul.mubr.bf16.gmra.mrb[0].mxu0 %v1201
        %v1355 = vpop.f32.mrb[0].mxu0
        %v1356 = vadd.f32 0.0, %v1355
        %v1357 = vpop.f32.mrb[0].mxu0
        %v1358 = vpop.f32.mrb[0].mxu0
        %v1359 = vadd.f32 0.0, %v1358
        %v1360 = vpop.f32.mrb[0].mxu0
        %1361 = vmatprep.mubr.bf16.mxu0 0
        %1362 = vmatmul.mubr.bf16.gmra.mrb[0].mxu0 %v1203
        %v1363 = vpop.f32.mrb[0].mxu0
        %v1364 = vadd.f32 0.0, %v1363
        %v1365 = vpop.f32.mrb[0].mxu0
        %v1366 = vpop.f32.mrb[0].mxu0
        %v1367 = vadd.f32 0.0, %v1366
        %v1368 = vpop.f32.mrb[0].mxu0
        %1369 = vdwg.mxu0
        %v1370 = vmax.f32 %v1244, 0.0
        %v1371 = vmax.f32 %v1247, 0.0
        %v1372 = vmax.f32 %v1252, 0.0
        %v1373 = vmax.f32 %v1255, 0.0
        %v1374 = vmax.f32 %v1260, 0.0
        %v1375 = vmax.f32 %v1263, 0.0
        %v1376 = vmax.f32 %v1268, 0.0
        %v1377 = vmax.f32 %v1271, 0.0
        %v1378 = vmax.f32 %v1276, 0.0
        %v1379 = vmax.f32 %v1279, 0.0
        %v1380 = vmax.f32 %v1284, 0.0
        %v1381 = vmax.f32 %v1287, 0.0
        %v1382 = vmax.f32 %v1292, 0.0
        %v1383 = vmax.f32 %v1295, 0.0
        %v1384 = vmax.f32 %v1300, 0.0
        %v1385 = vmax.f32 %v1303, 0.0
        %v1386 = vmax.f32 %v1308, 0.0
        %v1387 = vmax.f32 %v1311, 0.0
        %v1388 = vmax.f32 %v1316, 0.0
        %v1389 = vmax.f32 %v1319, 0.0
        %v1390 = vmax.f32 %v1324, 0.0
        %v1391 = vmax.f32 %v1327, 0.0
        %v1392 = vmax.f32 %v1332, 0.0
        %v1393 = vmax.f32 %v1335, 0.0
        %v1394 = vmax.f32 %v1340, 0.0
        %v1395 = vmax.f32 %v1343, 0.0
        %v1396 = vmax.f32 %v1348, 0.0
        %v1397 = vmax.f32 %v1351, 0.0
        %v1398 = vmax.f32 %v1356, 0.0
        %v1399 = vmax.f32 %v1359, 0.0
        %v1400 = vmax.f32 %v1364, 0.0
        %v1401 = vmax.f32 %v1367, 0.0
        %1402 = vst.msk [vmem:[%s150] sm:$0xff] %vm1119, %v1370
        %1403 = vst.msk [vmem:[%s150 + $0x8] sm:$0xff] %vm1119, %v1371
        %1404 = vst.msk [vmem:[%s150 + $0x10] sm:$0xff] %vm1119, %v1372
        %1405 = vst.msk [vmem:[%s150 + $0x18] sm:$0xff] %vm1119, %v1373
        %1406 = vst.msk [vmem:[%s150 + $0x20] sm:$0xff] %vm1119, %v1374
        %1407 = vst.msk [vmem:[%s150 + $0x28] sm:$0xff] %vm1119, %v1375
        %1408 = vst.msk [vmem:[%s150 + $0x30] sm:$0xff] %vm1119, %v1376
        %1409 = vst.msk [vmem:[%s150 + $0x38] sm:$0xff] %vm1119, %v1377
        %1410 = vst.msk [vmem:[%s150 + $0x40] sm:$0xff] %vm1119, %v1378
        %1411 = vst.msk [vmem:[%s150 + $0x48] sm:$0xff] %vm1119, %v1379
        %1412 = vst.msk [vmem:[%s150 + $0x50] sm:$0xff] %vm1119, %v1380
        %1413 = vst.msk [vmem:[%s150 + $0x58] sm:$0xff] %vm1119, %v1381
        %1414 = vst.msk [vmem:[%s150 + $0x60] sm:$0xff] %vm1119, %v1382
        %1415 = vst.msk [vmem:[%s150 + $0x68] sm:$0xff] %vm1119, %v1383
        %1416 = vst.msk [vmem:[%s150 + $0x70] sm:$0xff] %vm1119, %v1384
        %1417 = vst.msk [vmem:[%s150 + $0x78] sm:$0xff] %vm1119, %v1385
        %1418 = vst.msk [vmem:[%s150 + $0x80] sm:$0xff] %vm1119, %v1386
        %1419 = vst.msk [vmem:[%s150 + $0x88] sm:$0xff] %vm1119, %v1387
        %1420 = vst.msk [vmem:[%s150 + $0x90] sm:$0xff] %vm1119, %v1388
        %1421 = vst.msk [vmem:[%s150 + $0x98] sm:$0xff] %vm1119, %v1389
        %1422 = vst.msk [vmem:[%s150 + $0xa0] sm:$0xff] %vm1119, %v1390
        %1423 = vst.msk [vmem:[%s150 + $0xa8] sm:$0xff] %vm1119, %v1391
        %1424 = vst.msk [vmem:[%s150 + $0xb0] sm:$0xff] %vm1119, %v1392
        %1425 = vst.msk [vmem:[%s150 + $0xb8] sm:$0xff] %vm1119, %v1393
        %1426 = vst.msk [vmem:[%s150 + $0xc0] sm:$0xff] %vm1119, %v1394
        %1427 = vst.msk [vmem:[%s150 + $0xc8] sm:$0xff] %vm1119, %v1395
        %1428 = vst.msk [vmem:[%s150 + $0xd0] sm:$0xff] %vm1119, %v1396
        %1429 = vst.msk [vmem:[%s150 + $0xd8] sm:$0xff] %vm1119, %v1397
        %1430 = vst.msk [vmem:[%s150 + $0xe0] sm:$0xff] %vm1119, %v1398
        %1431 = vst.msk [vmem:[%s150 + $0xe8] sm:$0xff] %vm1119, %v1399
        %1432 = vst.msk [vmem:[%s150 + $0xf0] sm:$0xff] %vm1119, %v1400
        %1433 = vst.msk [vmem:[%s150 + $0xf8] sm:$0xff] %vm1119, %v1401
        %s1434 = sand.u32 %s85, 1
        %s1435 = scalar_lea.sflag [#allocation3], %s1434
        %s1436 = sand.u32 %s85, 1
        %s1437 = smul.addr %s1436, 256
        %s1438 = scalar_lea.vmem [#allocation2], %s1437
        // Predicated region
        $region29: #{bfcnn_forward.1} parent=27 // pred_check
          %p1439 = pneg %p95
        $region30: #{bfcnn_forward.1} parent=27 // pred_check_branch
          %1441 = sbr.rel (%p1439) target = $region32
        $region31: #{bfcnn_forward.1} parent=27 // pred_region
          %s1442 = smul.u32 16, %s21
          %s1444 = ssub.s32 4096, 4096
          %1445 = vsyncadd %s1435, %s1444
          %s1446 = smul.addr %s1442, 2
          %s1447 = smul.addr %s20, 32
          %s1448 = sadd.s32 %s1446, %s1447
          %s1449 = smul.addr %s1448, 128
          %s1450 = scalar_lea.hbm %s2, %s1449
          %s1451 = sshll.u32 %s1438, 4
          %s1452 = int_to_ptr.vmem [resolvable:$true] %s1451
          %1457 = dma.vmem_to_hbm [thread:$0]  %s1452, 4096, %s1450, %s1435, 128, 128, 8
        $region32: #{bfcnn_forward.1} parent=27 // pred_fallthru
          _
      $region28: #{bfcnn_forward.1} parent=5 // pred_fallthru
        _
      %p1458 = scmp.le.s32.totalorder 2, %s11
      // Predicated region
      $region33: #{bfcnn_forward.1} parent=5 // pred_check
        %p1459 = pneg %p1458
      $region34: #{bfcnn_forward.1} parent=5 // pred_check_branch
        %1461 = sbr.rel (%p1459) target = $region36
      $region35: #{bfcnn_forward.1} parent=5 // pred_region
        %s1462 = ssub.s32 %s11, 2
        // Predicated region
        $region37: #{bfcnn_forward.1} parent=35 // pred_check
          %p1463 = pneg %p101
        $region38: #{bfcnn_forward.1} parent=35 // pred_check_branch
          %1465 = sbr.rel (%p1463) target = $region40
        $region39: #{bfcnn_forward.1} parent=35 // pred_region
          %s1466 = sand.u32 %s86, 1
          %s1467 = scalar_lea.sflag [#allocation3], %s1466
          %s1468 = sand.u32 %s86, 1
          %s1469 = smul.addr %s1468, 256
          %s1470 = scalar_lea.vmem [#allocation2], %s1469
          %1471 = dma.done %s1467, 4096
        $region40: #{bfcnn_forward.1} parent=35 // pred_fallthru
          _
      $region36: #{bfcnn_forward.1} parent=5 // pred_fallthru
        _
    $region6: #{bfcnn_forward.1} parent=1 // loop_footer
      %s15 = sadd.s32 1, %s11
    $region7: #{bfcnn_forward.1} parent=1 // loop_footer_branch
      %10 = sbr.rel target = $region3
    $region8: #{bfcnn_forward.1} parent=1 // loop_exit
      _
    %1472 = vsyncpa [#allocation3], 1
    %s1473 = scalar_lea.sflag [#allocation3], 1
    %1474 = vsyncpa %s1473, 1

</llo_original>
